<compile_context>
chip_gen: v7x
topology: tpu7x:2x2x1
jax: 0.10.0
libtpu: 0.0.40
codegen_flags: <defaults>
</compile_context>

<pallas_src>
import functools

import jax
import jax.numpy as jnp
from jax.experimental import pallas as pl
from jax.experimental.pallas import tpu as pltpu


def _avgpool_kernel(x_ref, o_ref, xp_ref, rows_ref, *, kernel_size, stride,
                    padding, h, w, h_out, w_out):
    """x_ref: (H, W, NC_blk) unpadded block; o_ref: (H_out, W_out, NC_blk).

    xp_ref:   (H+2p, W+2p, NC_blk) f32 scratch — zero-padded plane (VMEM only).
    rows_ref: (H_out, W+2p, NC_blk) f32 scratch — row-stage partial sums.
    """
    pad = padding

    # 1) Build the zero-padded plane entirely in VMEM (no HBM pad pass).
    if pad > 0:
        xp_ref[...] = jnp.zeros_like(xp_ref)
        xp_ref[pad:pad + h, pad:pad + w, :] = x_ref[...].astype(jnp.float32)
    else:
        xp_ref[...] = x_ref[...].astype(jnp.float32)

    # Strided window slices; stride hits leading/sublane axes only (NC stays
    # on lanes), so there is no lane-axis strided access.
    def hsl(kh):
        return pl.ds(kh, h_out) if stride == 1 else pl.ds(kh, h_out, stride)

    def wsl(kw):
        return pl.ds(kw, w_out) if stride == 1 else pl.ds(kw, w_out, stride)

    # 2) Separable accumulation: k row-shifted adds ...
    rows_ref[...] = xp_ref[hsl(0), :, :]
    for kh in range(1, kernel_size):
        rows_ref[...] += xp_ref[hsl(kh), :, :]

    # ... then k column-shifted adds of the row partials.
    acc = rows_ref[:, wsl(0), :]
    for kw in range(1, kernel_size):
        acc = acc + rows_ref[:, wsl(kw), :]

    inv = 1.0 / float(kernel_size * kernel_size)  # count_include_pad=True
    o_ref[...] = (acc * inv).astype(o_ref.dtype)


def _pick_nc_block(h, w, h_pad, w_pad, h_out, w_out, itemsize, nc,
                   budget_bytes=6 * 1024 * 1024):
    """Lane-block width: multiple of 128, sized to a few MiB of VMEM so it is
    comfortably within scoped VMEM on v5e/v6e (32 MiB default) and v7x (64 MiB
    physical), while leaving room for double-buffering."""
    per_lane = (2 * h * w * itemsize            # double-buffered input block
                + 2 * h_out * w_out * itemsize  # double-buffered output block
                + (h_pad * w_pad + h_out * w_pad) * 4)  # f32 scratches
    blk = (budget_bytes // max(per_lane, 1)) // 128 * 128
    blk = max(128, min(int(blk), 2048))
    nc_lanes = -(-nc // 128) * 128
    return int(min(blk, nc_lanes))


def avg_pool2d(x, kernel_size, stride, padding):
    """x: (N, C, H, W) NCHW. Returns (N, C, H_out, W_out)."""
    n, c, h, w = x.shape
    h_out = (h + 2 * padding - kernel_size) // stride + 1
    w_out = (w + 2 * padding - kernel_size) // stride + 1
    h_pad, w_pad = h + 2 * padding, w + 2 * padding
    nc = n * c

    # Re-layout so N*C is the lane (last) axis: (N,C,H,W) -> (H, W, N*C).
    xt = jnp.transpose(x, (2, 3, 0, 1)).reshape(h, w, nc)

    nc_blk = _pick_nc_block(h, w, h_pad, w_pad, h_out, w_out,
                            x.dtype.itemsize, nc)
    nc_pad = pl.cdiv(nc, nc_blk) * nc_blk
    if nc_pad != nc:
        xt = jnp.pad(xt, ((0, 0), (0, 0), (0, nc_pad - nc)))

    # TODO(synk): for very large spatial extents (H*W*nc_blk exceeding VMEM),
    # additionally tile the H axis; not needed at these shapes.

    kernel = functools.partial(
        _avgpool_kernel,
        kernel_size=kernel_size,
        stride=stride,
        padding=padding,
        h=h,
        w=w,
        h_out=h_out,
        w_out=w_out,
    )

    out = pl.pallas_call(
        kernel,
        out_shape=jax.ShapeDtypeStruct((h_out, w_out, nc_pad), x.dtype),
        grid_spec=pltpu.PrefetchScalarGridSpec(
            num_scalar_prefetch=0,
            grid=(nc_pad // nc_blk,),
            # Last two dims: W (== full array dim) and nc_blk (multiple of 128).
            in_specs=[pl.BlockSpec((h, w, nc_blk), lambda i: (0, 0, i))],
            out_specs=pl.BlockSpec((h_out, w_out, nc_blk),
                                   lambda i: (0, 0, i)),
            scratch_shapes=[
                pltpu.VMEM((h_pad, w_pad, nc_blk), jnp.float32),
                pltpu.VMEM((h_out, w_pad, nc_blk), jnp.float32),
            ],
        ),
        compiler_params=pltpu.CompilerParams(
            dimension_semantics=("parallel",)
        ),
    )(xt)

    out = out[:, :, :nc].reshape(h_out, w_out, n, c)
    return jnp.transpose(out, (2, 3, 0, 1))


def _reference_avg_pool(x, kernel_size, stride, padding):
    """Pure-JAX reference (count_include_pad=True)."""
    summed = jax.lax.reduce_window(
        x,
        0.0,
        jax.lax.add,
        window_dimensions=(1, 1, kernel_size, kernel_size),
        window_strides=(1, 1, stride, stride),
        padding=((0, 0), (0, 0), (padding, padding), (padding, padding)),
    )
    return summed / float(kernel_size * kernel_size)


if __name__ == "__main__":
    # Module config (synthetic, deterministic): AvgPool(channels=4,
    # kernel_size=3, stride=1, padding=1). AvgPool2d has no parameters.
    channels, kernel_size, stride, padding = 4, 3, 1, 1

    key = jax.random.PRNGKey(0)
    x = jax.random.normal(key, (2, channels, 16, 16), dtype=jnp.float32)

    y = avg_pool2d(x, kernel_size, stride, padding)
    y = jax.block_until_ready(y)

    y_ref = _reference_avg_pool(x, kernel_size, stride, padding)
    assert y.shape == y_ref.shape, (y.shape, y_ref.shape)
    assert jnp.allclose(y, y_ref, atol=1e-5, rtol=1e-5), "mismatch vs reference"

    print("KERNEL_OK")
</pallas_src>

<mosaic_0001>
module attributes {stable_mosaic.version = 11 : i64} {
  func.func @_avgpool_kernel(%arg0: i32, %arg1: memref<16x16x128xf32, #tpu.memory_space<vmem>>, %arg2: memref<16x16x128xf32, #tpu.memory_space<vmem>>, %arg3: memref<18x18x128xf32, #tpu.memory_space<vmem>>, %arg4: memref<16x18x128xf32, #tpu.memory_space<vmem>>) attributes {dimension_semantics = [#tpu.dimension_semantics<parallel>], iteration_bounds = array<i64: 1>, scalar_prefetch = 0 : i64, scratch_operands = 2 : i64, tpu.core_type = #tpu.core_type<tc>, window_params = [{transform_indices = @transform_0, window_bounds = array<i64: 16, 16, 128>}, {transform_indices = @transform_1, window_bounds = array<i64: 16, 16, 128>}]} {
    %cst = arith.constant 0.000000e+00 : f32
    %0 = vector.broadcast %cst : f32 to vector<18x18x128xf32>
    %c0 = arith.constant 0 : index
    %c0_0 = arith.constant 0 : index
    %c0_1 = arith.constant 0 : index
    %1 = vector.load %arg3[%c0, %c0_0, %c0_1] : memref<18x18x128xf32, #tpu.memory_space<vmem>>, vector<18x18x128xf32>
    tpu.vector_store %arg3[%c0, %c0_0, %c0_1], %0 {strides = array<i32>} : memref<18x18x128xf32, #tpu.memory_space<vmem>>, vector<18x18x128xf32>,
    %c0_2 = arith.constant 0 : index
    %c0_3 = arith.constant 0 : index
    %c0_4 = arith.constant 0 : index
    %2 = vector.load %arg1[%c0_2, %c0_3, %c0_4] : memref<16x16x128xf32, #tpu.memory_space<vmem>>, vector<16x16x128xf32>
    %c1 = arith.constant 1 : index
    %c1_5 = arith.constant 1 : index
    %c0_6 = arith.constant 0 : index
    %3 = vector.load %arg3[%c1, %c1_5, %c0_6] : memref<18x18x128xf32, #tpu.memory_space<vmem>>, vector<16x16x128xf32>
    tpu.vector_store %arg3[%c1, %c1_5, %c0_6], %2 {strides = array<i32>} : memref<18x18x128xf32, #tpu.memory_space<vmem>>, vector<16x16x128xf32>,
    %c0_7 = arith.constant 0 : index
    %c0_8 = arith.constant 0 : index
    %c0_9 = arith.constant 0 : index
    %4 = vector.load %arg3[%c0_7, %c0_8, %c0_9] : memref<18x18x128xf32, #tpu.memory_space<vmem>>, vector<16x18x128xf32>
    %c0_10 = arith.constant 0 : index
    %c0_11 = arith.constant 0 : index
    %c0_12 = arith.constant 0 : index
    %5 = vector.load %arg4[%c0_10, %c0_11, %c0_12] : memref<16x18x128xf32, #tpu.memory_space<vmem>>, vector<16x18x128xf32>
    tpu.vector_store %arg4[%c0_10, %c0_11, %c0_12], %4 {strides = array<i32>} : memref<16x18x128xf32, #tpu.memory_space<vmem>>, vector<16x18x128xf32>,
    %c0_13 = arith.constant 0 : index
    %c0_14 = arith.constant 0 : index
    %c0_15 = arith.constant 0 : index
    %6 = vector.load %arg4[%c0_13, %c0_14, %c0_15] : memref<16x18x128xf32, #tpu.memory_space<vmem>>, vector<16x18x128xf32>
    %c1_16 = arith.constant 1 : index
    %c0_17 = arith.constant 0 : index
    %c0_18 = arith.constant 0 : index
    %7 = vector.load %arg3[%c1_16, %c0_17, %c0_18] : memref<18x18x128xf32, #tpu.memory_space<vmem>>, vector<16x18x128xf32>
    %8 = arith.addf %6, %7 : vector<16x18x128xf32>
    %c0_19 = arith.constant 0 : index
    %c0_20 = arith.constant 0 : index
    %c0_21 = arith.constant 0 : index
    %9 = vector.load %arg4[%c0_19, %c0_20, %c0_21] : memref<16x18x128xf32, #tpu.memory_space<vmem>>, vector<16x18x128xf32>
    tpu.vector_store %arg4[%c0_19, %c0_20, %c0_21], %8 {strides = array<i32>} : memref<16x18x128xf32, #tpu.memory_space<vmem>>, vector<16x18x128xf32>,
    %c0_22 = arith.constant 0 : index
    %c0_23 = arith.constant 0 : index
    %c0_24 = arith.constant 0 : index
    %10 = vector.load %arg4[%c0_22, %c0_23, %c0_24] : memref<16x18x128xf32, #tpu.memory_space<vmem>>, vector<16x18x128xf32>
    %c2 = arith.constant 2 : index
    %c0_25 = arith.constant 0 : index
    %c0_26 = arith.constant 0 : index
    %11 = vector.load %arg3[%c2, %c0_25, %c0_26] : memref<18x18x128xf32, #tpu.memory_space<vmem>>, vector<16x18x128xf32>
    %12 = arith.addf %10, %11 : vector<16x18x128xf32>
    %c0_27 = arith.constant 0 : index
    %c0_28 = arith.constant 0 : index
    %c0_29 = arith.constant 0 : index
    %13 = vector.load %arg4[%c0_27, %c0_28, %c0_29] : memref<16x18x128xf32, #tpu.memory_space<vmem>>, vector<16x18x128xf32>
    tpu.vector_store %arg4[%c0_27, %c0_28, %c0_29], %12 {strides = array<i32>} : memref<16x18x128xf32, #tpu.memory_space<vmem>>, vector<16x18x128xf32>,
    %c0_30 = arith.constant 0 : index
    %c0_31 = arith.constant 0 : index
    %c0_32 = arith.constant 0 : index
    %14 = vector.load %arg4[%c0_30, %c0_31, %c0_32] : memref<16x18x128xf32, #tpu.memory_space<vmem>>, vector<16x16x128xf32>
    %c0_33 = arith.constant 0 : index
    %c1_34 = arith.constant 1 : index
    %c0_35 = arith.constant 0 : index
    %15 = vector.load %arg4[%c0_33, %c1_34, %c0_35] : memref<16x18x128xf32, #tpu.memory_space<vmem>>, vector<16x16x128xf32>
    %16 = arith.addf %14, %15 : vector<16x16x128xf32>
    %c0_36 = arith.constant 0 : index
    %c2_37 = arith.constant 2 : index
    %c0_38 = arith.constant 0 : index
    %17 = vector.load %arg4[%c0_36, %c2_37, %c0_38] : memref<16x18x128xf32, #tpu.memory_space<vmem>>, vector<16x16x128xf32>
    %18 = arith.addf %16, %17 : vector<16x16x128xf32>
    %cst_39 = arith.constant 0.111111112 : f32
    %19 = vector.broadcast %cst_39 : f32 to vector<16x16x128xf32>
    %20 = arith.mulf %18, %19 : vector<16x16x128xf32>
    %c0_40 = arith.constant 0 : index
    %c0_41 = arith.constant 0 : index
    %c0_42 = arith.constant 0 : index
    %21 = vector.load %arg2[%c0_40, %c0_41, %c0_42] : memref<16x16x128xf32, #tpu.memory_space<vmem>>, vector<16x16x128xf32>
    tpu.vector_store %arg2[%c0_40, %c0_41, %c0_42], %20 {strides = array<i32>} : memref<16x16x128xf32, #tpu.memory_space<vmem>>, vector<16x16x128xf32>,
    return
  }
  func.func @transform_0(%arg0: i32) -> (i32, i32, i32) {
    %c0_i32 = arith.constant 0 : i32
    %c0_i32_0 = arith.constant 0 : i32
    %c0_i32_1 = arith.constant 0 : i32
    return %c0_i32, %c0_i32_0, %arg0 : i32, i32, i32
  }
  func.func @transform_1(%arg0: i32) -> (i32, i32, i32) {
    %c0_i32 = arith.constant 0 : i32
    %c0_i32_0 = arith.constant 0 : i32
    %c0_i32_1 = arith.constant 0 : i32
    return %c0_i32, %c0_i32_0, %arg0 : i32, i32, i32
  }
}

</mosaic_0001>

<llo_original>
// kernel: tpu_custom_call.1
$region0: #{tpu_custom_call.1}
  #allocation0 [shape = 'u32[]', space=smem, size = 0x4, offset = 0x4, fixed_abs, tag = 'smem constant byte address 0x4 - core index']
  #allocation1 [shape = 'u32[144,128]{1,0:T(1,128)}', space=vmem, size = 0x12000, scoped, tag = 'internal scratch']
  #allocation2 [shape = 'f32[18,18,128]{2,1,0:T(8,128)}', space=vmem, size = 0x36000, scoped, tag = 'scratch operand']
  #allocation3 [shape = 'f32[16,18,128]{2,1,0:T(8,128)}', space=vmem, size = 0x30000, scoped, tag = 'scratch operand']
  %s0 = inlined_call_operand.hbm [shape: f32[16,16,128], index: 0, kind: input, shape index: {}]
  %s1 = inlined_call_operand.hbm [shape: f32[16,16,128], index: 1, kind: output, shape index: {}]
  %s2 = sld [smem:[#allocation0]]
  $region18: #{tpu_custom_call.1} parent=0
    _
  %s4 = ssub.s32 1, %s2
  %s5 = scalar_select 0, %s4, %s2
  $region1: #{tpu_custom_call.1} parent=0
    #allocation4 [shape = 'u8[131072]{0}', space=vmem, size = 0x20000, scoped, tag = 'input window, operand 0, single buffered']
    #allocation5 [shape = 's32[1]{0}', space=sflag, size = 0x4, scoped, tag = 'scoped memory for tpu_custom_call.1']
    #allocation6 [shape = 's32[1]{0}', space=sflag, size = 0x4, scoped, tag = 'scoped memory for tpu_custom_call.1']
    #allocation7 [shape = 'u8[131072]{0}', space=vmem, size = 0x20000, scoped, tag = 'output window, operand 0, single buffered']
    %6 = vsyncpa [#allocation5], 0
    %7 = vsyncpa [#allocation6], 0
    // Predicated region
    $region2: #{tpu_custom_call.1} parent=1 // pred_check
      _
    $region3: #{tpu_custom_call.1} parent=1 // pred_check_branch
      %9 = sbr.rel (0) target = $region5
    $region4: #{tpu_custom_call.1} parent=1 // pred_region
      %s11 = ssub.s32 4096, 4096
      %12 = vsyncadd [#allocation5], %s11
      %s13 = sshll.u32 [#allocation4], 4
      %s14 = int_to_ptr.vmem [resolvable:$true] %s13
      %19 = dma.hbm_to_vmem [thread:$0]  %s0, 4096, %s14, [#allocation5], 128, 128, 8
    $region5: #{tpu_custom_call.1} parent=1 // pred_fallthru
      _
    // Predicated region
    $region6: #{tpu_custom_call.1} parent=1 // pred_check
      _
    $region7: #{tpu_custom_call.1} parent=1 // pred_check_branch
      %21 = sbr.rel (0) target = $region9
    $region8: #{tpu_custom_call.1} parent=1 // pred_region
      %22 = dma.done [#allocation5], 4096
    $region9: #{tpu_custom_call.1} parent=1 // pred_fallthru
      _
    %23 = vst [vmem:[#allocation2] sm:$0xff] 0.0
    %24 = vst [vmem:[#allocation2 + $0x8] sm:$0xff] 0.0
    %25 = vst [vmem:[#allocation2 + $0x10] sm:$0x3] 0.0
    %26 = vst [vmem:[#allocation2 + $0x18] sm:$0xff] 0.0
    %27 = vst [vmem:[#allocation2 + $0x20] sm:$0xff] 0.0
    %28 = vst [vmem:[#allocation2 + $0x28] sm:$0x3] 0.0
    %29 = vst [vmem:[#allocation2 + $0x30] sm:$0xff] 0.0
    %30 = vst [vmem:[#allocation2 + $0x38] sm:$0xff] 0.0
    %31 = vst [vmem:[#allocation2 + $0x40] sm:$0x3] 0.0
    %32 = vst [vmem:[#allocation2 + $0x48] sm:$0xff] 0.0
    %33 = vst [vmem:[#allocation2 + $0x50] sm:$0xff] 0.0
    %34 = vst [vmem:[#allocation2 + $0x58] sm:$0x3] 0.0
    %35 = vst [vmem:[#allocation2 + $0x60] sm:$0xff] 0.0
    %36 = vst [vmem:[#allocation2 + $0x68] sm:$0xff] 0.0
    %37 = vst [vmem:[#allocation2 + $0x70] sm:$0x3] 0.0
    %38 = vst [vmem:[#allocation2 + $0x78] sm:$0xff] 0.0
    %39 = vst [vmem:[#allocation2 + $0x80] sm:$0xff] 0.0
    %40 = vst [vmem:[#allocation2 + $0x88] sm:$0x3] 0.0
    %41 = vst [vmem:[#allocation2 + $0x90] sm:$0xff] 0.0
    %42 = vst [vmem:[#allocation2 + $0x98] sm:$0xff] 0.0
    %43 = vst [vmem:[#allocation2 + $0xa0] sm:$0x3] 0.0
    %44 = vst [vmem:[#allocation2 + $0xa8] sm:$0xff] 0.0
    %45 = vst [vmem:[#allocation2 + $0xb0] sm:$0xff] 0.0
    %46 = vst [vmem:[#allocation2 + $0xb8] sm:$0x3] 0.0
    %47 = vst [vmem:[#allocation2 + $0xc0] sm:$0xff] 0.0
    %48 = vst [vmem:[#allocation2 + $0xc8] sm:$0xff] 0.0
    %49 = vst [vmem:[#allocation2 + $0xd0] sm:$0x3] 0.0
    %50 = vst [vmem:[#allocation2 + $0xd8] sm:$0xff] 0.0
    %51 = vst [vmem:[#allocation2 + $0xe0] sm:$0xff] 0.0
    %52 = vst [vmem:[#allocation2 + $0xe8] sm:$0x3] 0.0
    %53 = vst [vmem:[#allocation2 + $0xf0] sm:$0xff] 0.0
    %54 = vst [vmem:[#allocation2 + $0xf8] sm:$0xff] 0.0
    %55 = vst [vmem:[#allocation2 + $0x100] sm:$0x3] 0.0
    %56 = vst [vmem:[#allocation2 + $0x108] sm:$0xff] 0.0
    %57 = vst [vmem:[#allocation2 + $0x110] sm:$0xff] 0.0
    %58 = vst [vmem:[#allocation2 + $0x118] sm:$0x3] 0.0
    %59 = vst [vmem:[#allocation2 + $0x120] sm:$0xff] 0.0
    %60 = vst [vmem:[#allocation2 + $0x128] sm:$0xff] 0.0
    %61 = vst [vmem:[#allocation2 + $0x130] sm:$0x3] 0.0
    %62 = vst [vmem:[#allocation2 + $0x138] sm:$0xff] 0.0
    %63 = vst [vmem:[#allocation2 + $0x140] sm:$0xff] 0.0
    %64 = vst [vmem:[#allocation2 + $0x148] sm:$0x3] 0.0
    %65 = vst [vmem:[#allocation2 + $0x150] sm:$0xff] 0.0
    %66 = vst [vmem:[#allocation2 + $0x158] sm:$0xff] 0.0
    %67 = vst [vmem:[#allocation2 + $0x160] sm:$0x3] 0.0
    %68 = vst [vmem:[#allocation2 + $0x168] sm:$0xff] 0.0
    %69 = vst [vmem:[#allocation2 + $0x170] sm:$0xff] 0.0
    %70 = vst [vmem:[#allocation2 + $0x178] sm:$0x3] 0.0
    %71 = vst [vmem:[#allocation2 + $0x180] sm:$0xff] 0.0
    %72 = vst [vmem:[#allocation2 + $0x188] sm:$0xff] 0.0
    %73 = vst [vmem:[#allocation2 + $0x190] sm:$0x3] 0.0
    %74 = vst [vmem:[#allocation2 + $0x198] sm:$0xff] 0.0
    %75 = vst [vmem:[#allocation2 + $0x1a0] sm:$0xff] 0.0
    %76 = vst [vmem:[#allocation2 + $0x1a8] sm:$0x3] 0.0
    %v77 = vld [vmem:[#allocation4] sm:$0xff]
    %v78 = vld [vmem:[#allocation4 + $0x8] sm:$0xff]
    %v79 = vld [vmem:[#allocation4 + $0x10] sm:$0xff]
    %v80 = vld [vmem:[#allocation4 + $0x18] sm:$0xff]
    %v81 = vld [vmem:[#allocation4 + $0x20] sm:$0xff]
    %v82 = vld [vmem:[#allocation4 + $0x28] sm:$0xff]
    %v83 = vld [vmem:[#allocation4 + $0x30] sm:$0xff]
    %v84 = vld [vmem:[#allocation4 + $0x38] sm:$0xff]
    %v85 = vld [vmem:[#allocation4 + $0x40] sm:$0xff]
    %v86 = vld [vmem:[#allocation4 + $0x48] sm:$0xff]
    %v87 = vld [vmem:[#allocation4 + $0x50] sm:$0xff]
    %v88 = vld [vmem:[#allocation4 + $0x58] sm:$0xff]
    %v89 = vld [vmem:[#allocation4 + $0x60] sm:$0xff]
    %v90 = vld [vmem:[#allocation4 + $0x68] sm:$0xff]
    %v91 = vld [vmem:[#allocation4 + $0x70] sm:$0xff]
    %v92 = vld [vmem:[#allocation4 + $0x78] sm:$0xff]
    %v93 = vld [vmem:[#allocation4 + $0x80] sm:$0xff]
    %v94 = vld [vmem:[#allocation4 + $0x88] sm:$0xff]
    %v95 = vld [vmem:[#allocation4 + $0x90] sm:$0xff]
    %v96 = vld [vmem:[#allocation4 + $0x98] sm:$0xff]
    %v97 = vld [vmem:[#allocation4 + $0xa0] sm:$0xff]
    %v98 = vld [vmem:[#allocation4 + $0xa8] sm:$0xff]
    %v99 = vld [vmem:[#allocation4 + $0xb0] sm:$0xff]
    %v100 = vld [vmem:[#allocation4 + $0xb8] sm:$0xff]
    %v101 = vld [vmem:[#allocation4 + $0xc0] sm:$0xff]
    %v102 = vld [vmem:[#allocation4 + $0xc8] sm:$0xff]
    %v103 = vld [vmem:[#allocation4 + $0xd0] sm:$0xff]
    %v104 = vld [vmem:[#allocation4 + $0xd8] sm:$0xff]
    %v105 = vld [vmem:[#allocation4 + $0xe0] sm:$0xff]
    %v106 = vld [vmem:[#allocation4 + $0xe8] sm:$0xff]
    %v107 = vld [vmem:[#allocation4 + $0xf0] sm:$0xff]
    %v108 = vld [vmem:[#allocation4 + $0xf8] sm:$0xff]
    %s109 = scalar_lea.vmem [#allocation2], 24
    %110 = vst [vmem:[%s109 + $0x1] sm:$0xff] %v77
    %111 = vst [vmem:[%s109 + $0x9] sm:$0xff] %v78
    %112 = vst [vmem:[%s109 + $0x19] sm:$0xff] %v79
    %113 = vst [vmem:[%s109 + $0x21] sm:$0xff] %v80
    %114 = vst [vmem:[%s109 + $0x31] sm:$0xff] %v81
    %115 = vst [vmem:[%s109 + $0x39] sm:$0xff] %v82
    %116 = vst [vmem:[%s109 + $0x49] sm:$0xff] %v83
    %117 = vst [vmem:[%s109 + $0x51] sm:$0xff] %v84
    %118 = vst [vmem:[%s109 + $0x61] sm:$0xff] %v85
    %119 = vst [vmem:[%s109 + $0x69] sm:$0xff] %v86
    %120 = vst [vmem:[%s109 + $0x79] sm:$0xff] %v87
    %121 = vst [vmem:[%s109 + $0x81] sm:$0xff] %v88
    %122 = vst [vmem:[%s109 + $0x91] sm:$0xff] %v89
    %123 = vst [vmem:[%s109 + $0x99] sm:$0xff] %v90
    %124 = vst [vmem:[%s109 + $0xa9] sm:$0xff] %v91
    %125 = vst [vmem:[%s109 + $0xb1] sm:$0xff] %v92
    %126 = vst [vmem:[%s109 + $0xc1] sm:$0xff] %v93
    %127 = vst [vmem:[%s109 + $0xc9] sm:$0xff] %v94
    %128 = vst [vmem:[%s109 + $0xd9] sm:$0xff] %v95
    %129 = vst [vmem:[%s109 + $0xe1] sm:$0xff] %v96
    %130 = vst [vmem:[%s109 + $0xf1] sm:$0xff] %v97
    %131 = vst [vmem:[%s109 + $0xf9] sm:$0xff] %v98
    %132 = vst [vmem:[%s109 + $0x109] sm:$0xff] %v99
    %133 = vst [vmem:[%s109 + $0x111] sm:$0xff] %v100
    %134 = vst [vmem:[%s109 + $0x121] sm:$0xff] %v101
    %135 = vst [vmem:[%s109 + $0x129] sm:$0xff] %v102
    %136 = vst [vmem:[%s109 + $0x139] sm:$0xff] %v103
    %137 = vst [vmem:[%s109 + $0x141] sm:$0xff] %v104
    %138 = vst [vmem:[%s109 + $0x151] sm:$0xff] %v105
    %139 = vst [vmem:[%s109 + $0x159] sm:$0xff] %v106
    %140 = vst [vmem:[%s109 + $0x169] sm:$0xff] %v107
    %141 = vst [vmem:[%s109 + $0x171] sm:$0xff] %v108
    %v142 = vld [vmem:[#allocation2] sm:$0xff]
    %v143 = vld [vmem:[#allocation2 + $0x8] sm:$0xff]
    %v144 = vld [vmem:[#allocation2 + $0x10] sm:$0x3]
    %v145 = vld [vmem:[#allocation2 + $0x18] sm:$0xff]
    %v146 = vld [vmem:[#allocation2 + $0x20] sm:$0xff]
    %v147 = vld [vmem:[#allocation2 + $0x28] sm:$0x3]
    %v148 = vld [vmem:[#allocation2 + $0x30] sm:$0xff]
    %v149 = vld [vmem:[#allocation2 + $0x38] sm:$0xff]
    %v150 = vld [vmem:[#allocation2 + $0x40] sm:$0x3]
    %v151 = vld [vmem:[#allocation2 + $0x48] sm:$0xff]
    %v152 = vld [vmem:[#allocation2 + $0x50] sm:$0xff]
    %v153 = vld [vmem:[#allocation2 + $0x58] sm:$0x3]
    %v154 = vld [vmem:[#allocation2 + $0x60] sm:$0xff]
    %v155 = vld [vmem:[#allocation2 + $0x68] sm:$0xff]
    %v156 = vld [vmem:[#allocation2 + $0x70] sm:$0x3]
    %v157 = vld [vmem:[#allocation2 + $0x78] sm:$0xff]
    %v158 = vld [vmem:[#allocation2 + $0x80] sm:$0xff]
    %v159 = vld [vmem:[#allocation2 + $0x88] sm:$0x3]
    %v160 = vld [vmem:[#allocation2 + $0x90] sm:$0xff]
    %v161 = vld [vmem:[#allocation2 + $0x98] sm:$0xff]
    %v162 = vld [vmem:[#allocation2 + $0xa0] sm:$0x3]
    %v163 = vld [vmem:[#allocation2 + $0xa8] sm:$0xff]
    %v164 = vld [vmem:[#allocation2 + $0xb0] sm:$0xff]
    %v165 = vld [vmem:[#allocation2 + $0xb8] sm:$0x3]
    %v166 = vld [vmem:[#allocation2 + $0xc0] sm:$0xff]
    %v167 = vld [vmem:[#allocation2 + $0xc8] sm:$0xff]
    %v168 = vld [vmem:[#allocation2 + $0xd0] sm:$0x3]
    %v169 = vld [vmem:[#allocation2 + $0xd8] sm:$0xff]
    %v170 = vld [vmem:[#allocation2 + $0xe0] sm:$0xff]
    %v171 = vld [vmem:[#allocation2 + $0xe8] sm:$0x3]
    %v172 = vld [vmem:[#allocation2 + $0xf0] sm:$0xff]
    %v173 = vld [vmem:[#allocation2 + $0xf8] sm:$0xff]
    %v174 = vld [vmem:[#allocation2 + $0x100] sm:$0x3]
    %v175 = vld [vmem:[#allocation2 + $0x108] sm:$0xff]
    %v176 = vld [vmem:[#allocation2 + $0x110] sm:$0xff]
    %v177 = vld [vmem:[#allocation2 + $0x118] sm:$0x3]
    %v178 = vld [vmem:[#allocation2 + $0x120] sm:$0xff]
    %v179 = vld [vmem:[#allocation2 + $0x128] sm:$0xff]
    %v180 = vld [vmem:[#allocation2 + $0x130] sm:$0x3]
    %v181 = vld [vmem:[#allocation2 + $0x138] sm:$0xff]
    %v182 = vld [vmem:[#allocation2 + $0x140] sm:$0xff]
    %v183 = vld [vmem:[#allocation2 + $0x148] sm:$0x3]
    %v184 = vld [vmem:[#allocation2 + $0x150] sm:$0xff]
    %v185 = vld [vmem:[#allocation2 + $0x158] sm:$0xff]
    %v186 = vld [vmem:[#allocation2 + $0x160] sm:$0x3]
    %v187 = vld [vmem:[#allocation2 + $0x168] sm:$0xff]
    %v188 = vld [vmem:[#allocation2 + $0x170] sm:$0xff]
    %v189 = vld [vmem:[#allocation2 + $0x178] sm:$0x3]
    %190 = vst [vmem:[#allocation3] sm:$0xff] %v142
    %191 = vst [vmem:[#allocation3 + $0x8] sm:$0xff] %v143
    %192 = vst [vmem:[#allocation3 + $0x10] sm:$0x3] %v144
    %193 = vst [vmem:[#allocation3 + $0x18] sm:$0xff] %v145
    %194 = vst [vmem:[#allocation3 + $0x20] sm:$0xff] %v146
    %195 = vst [vmem:[#allocation3 + $0x28] sm:$0x3] %v147
    %196 = vst [vmem:[#allocation3 + $0x30] sm:$0xff] %v148
    %197 = vst [vmem:[#allocation3 + $0x38] sm:$0xff] %v149
    %198 = vst [vmem:[#allocation3 + $0x40] sm:$0x3] %v150
    %199 = vst [vmem:[#allocation3 + $0x48] sm:$0xff] %v151
    %200 = vst [vmem:[#allocation3 + $0x50] sm:$0xff] %v152
    %201 = vst [vmem:[#allocation3 + $0x58] sm:$0x3] %v153
    %202 = vst [vmem:[#allocation3 + $0x60] sm:$0xff] %v154
    %203 = vst [vmem:[#allocation3 + $0x68] sm:$0xff] %v155
    %204 = vst [vmem:[#allocation3 + $0x70] sm:$0x3] %v156
    %205 = vst [vmem:[#allocation3 + $0x78] sm:$0xff] %v157
    %206 = vst [vmem:[#allocation3 + $0x80] sm:$0xff] %v158
    %207 = vst [vmem:[#allocation3 + $0x88] sm:$0x3] %v159
    %208 = vst [vmem:[#allocation3 + $0x90] sm:$0xff] %v160
    %209 = vst [vmem:[#allocation3 + $0x98] sm:$0xff] %v161
    %210 = vst [vmem:[#allocation3 + $0xa0] sm:$0x3] %v162
    %211 = vst [vmem:[#allocation3 + $0xa8] sm:$0xff] %v163
    %212 = vst [vmem:[#allocation3 + $0xb0] sm:$0xff] %v164
    %213 = vst [vmem:[#allocation3 + $0xb8] sm:$0x3] %v165
    %214 = vst [vmem:[#allocation3 + $0xc0] sm:$0xff] %v166
    %215 = vst [vmem:[#allocation3 + $0xc8] sm:$0xff] %v167
    %216 = vst [vmem:[#allocation3 + $0xd0] sm:$0x3] %v168
    %217 = vst [vmem:[#allocation3 + $0xd8] sm:$0xff] %v169
    %218 = vst [vmem:[#allocation3 + $0xe0] sm:$0xff] %v170
    %219 = vst [vmem:[#allocation3 + $0xe8] sm:$0x3] %v171
    %220 = vst [vmem:[#allocation3 + $0xf0] sm:$0xff] %v172
    %221 = vst [vmem:[#allocation3 + $0xf8] sm:$0xff] %v173
    %222 = vst [vmem:[#allocation3 + $0x100] sm:$0x3] %v174
    %223 = vst [vmem:[#allocation3 + $0x108] sm:$0xff] %v175
    %224 = vst [vmem:[#allocation3 + $0x110] sm:$0xff] %v176
    %225 = vst [vmem:[#allocation3 + $0x118] sm:$0x3] %v177
    %226 = vst [vmem:[#allocation3 + $0x120] sm:$0xff] %v178
    %227 = vst [vmem:[#allocation3 + $0x128] sm:$0xff] %v179
    %228 = vst [vmem:[#allocation3 + $0x130] sm:$0x3] %v180
    %229 = vst [vmem:[#allocation3 + $0x138] sm:$0xff] %v181
    %230 = vst [vmem:[#allocation3 + $0x140] sm:$0xff] %v182
    %231 = vst [vmem:[#allocation3 + $0x148] sm:$0x3] %v183
    %232 = vst [vmem:[#allocation3 + $0x150] sm:$0xff] %v184
    %233 = vst [vmem:[#allocation3 + $0x158] sm:$0xff] %v185
    %234 = vst [vmem:[#allocation3 + $0x160] sm:$0x3] %v186
    %235 = vst [vmem:[#allocation3 + $0x168] sm:$0xff] %v187
    %236 = vst [vmem:[#allocation3 + $0x170] sm:$0xff] %v188
    %237 = vst [vmem:[#allocation3 + $0x178] sm:$0x3] %v189
    %v238 = vld [vmem:[#allocation3] sm:$0xff]
    %v239 = vld [vmem:[#allocation3 + $0x8] sm:$0xff]
    %v240 = vld [vmem:[#allocation3 + $0x10] sm:$0x3]
    %v241 = vld [vmem:[#allocation3 + $0x18] sm:$0xff]
    %v242 = vld [vmem:[#allocation3 + $0x20] sm:$0xff]
    %v243 = vld [vmem:[#allocation3 + $0x28] sm:$0x3]
    %v244 = vld [vmem:[#allocation3 + $0x30] sm:$0xff]
    %v245 = vld [vmem:[#allocation3 + $0x38] sm:$0xff]
    %v246 = vld [vmem:[#allocation3 + $0x40] sm:$0x3]
    %v247 = vld [vmem:[#allocation3 + $0x48] sm:$0xff]
    %v248 = vld [vmem:[#allocation3 + $0x50] sm:$0xff]
    %v249 = vld [vmem:[#allocation3 + $0x58] sm:$0x3]
    %v250 = vld [vmem:[#allocation3 + $0x60] sm:$0xff]
    %v251 = vld [vmem:[#allocation3 + $0x68] sm:$0xff]
    %v252 = vld [vmem:[#allocation3 + $0x70] sm:$0x3]
    %v253 = vld [vmem:[#allocation3 + $0x78] sm:$0xff]
    %v254 = vld [vmem:[#allocation3 + $0x80] sm:$0xff]
    %v255 = vld [vmem:[#allocation3 + $0x88] sm:$0x3]
    %v256 = vld [vmem:[#allocation3 + $0x90] sm:$0xff]
    %v257 = vld [vmem:[#allocation3 + $0x98] sm:$0xff]
    %v258 = vld [vmem:[#allocation3 + $0xa0] sm:$0x3]
    %v259 = vld [vmem:[#allocation3 + $0xa8] sm:$0xff]
    %v260 = vld [vmem:[#allocation3 + $0xb0] sm:$0xff]
    %v261 = vld [vmem:[#allocation3 + $0xb8] sm:$0x3]
    %v262 = vld [vmem:[#allocation3 + $0xc0] sm:$0xff]
    %v263 = vld [vmem:[#allocation3 + $0xc8] sm:$0xff]
    %v264 = vld [vmem:[#allocation3 + $0xd0] sm:$0x3]
    %v265 = vld [vmem:[#allocation3 + $0xd8] sm:$0xff]
    %v266 = vld [vmem:[#allocation3 + $0xe0] sm:$0xff]
    %v267 = vld [vmem:[#allocation3 + $0xe8] sm:$0x3]
    %v268 = vld [vmem:[#allocation3 + $0xf0] sm:$0xff]
    %v269 = vld [vmem:[#allocation3 + $0xf8] sm:$0xff]
    %v270 = vld [vmem:[#allocation3 + $0x100] sm:$0x3]
    %v271 = vld [vmem:[#allocation3 + $0x108] sm:$0xff]
    %v272 = vld [vmem:[#allocation3 + $0x110] sm:$0xff]
    %v273 = vld [vmem:[#allocation3 + $0x118] sm:$0x3]
    %v274 = vld [vmem:[#allocation3 + $0x120] sm:$0xff]
    %v275 = vld [vmem:[#allocation3 + $0x128] sm:$0xff]
    %v276 = vld [vmem:[#allocation3 + $0x130] sm:$0x3]
    %v277 = vld [vmem:[#allocation3 + $0x138] sm:$0xff]
    %v278 = vld [vmem:[#allocation3 + $0x140] sm:$0xff]
    %v279 = vld [vmem:[#allocation3 + $0x148] sm:$0x3]
    %v280 = vld [vmem:[#allocation3 + $0x150] sm:$0xff]
    %v281 = vld [vmem:[#allocation3 + $0x158] sm:$0xff]
    %v282 = vld [vmem:[#allocation3 + $0x160] sm:$0x3]
    %v283 = vld [vmem:[#allocation3 + $0x168] sm:$0xff]
    %v284 = vld [vmem:[#allocation3 + $0x170] sm:$0xff]
    %v285 = vld [vmem:[#allocation3 + $0x178] sm:$0x3]
    %v286 = vld [vmem:[%s109] sm:$0xff]
    %v287 = vld [vmem:[%s109 + $0x8] sm:$0xff]
    %v288 = vld [vmem:[%s109 + $0x10] sm:$0x3]
    %v289 = vld [vmem:[%s109 + $0x18] sm:$0xff]
    %v290 = vld [vmem:[%s109 + $0x20] sm:$0xff]
    %v291 = vld [vmem:[%s109 + $0x28] sm:$0x3]
    %v292 = vld [vmem:[%s109 + $0x30] sm:$0xff]
    %v293 = vld [vmem:[%s109 + $0x38] sm:$0xff]
    %v294 = vld [vmem:[%s109 + $0x40] sm:$0x3]
    %v295 = vld [vmem:[%s109 + $0x48] sm:$0xff]
    %v296 = vld [vmem:[%s109 + $0x50] sm:$0xff]
    %v297 = vld [vmem:[%s109 + $0x58] sm:$0x3]
    %v298 = vld [vmem:[%s109 + $0x60] sm:$0xff]
    %v299 = vld [vmem:[%s109 + $0x68] sm:$0xff]
    %v300 = vld [vmem:[%s109 + $0x70] sm:$0x3]
    %v301 = vld [vmem:[%s109 + $0x78] sm:$0xff]
    %v302 = vld [vmem:[%s109 + $0x80] sm:$0xff]
    %v303 = vld [vmem:[%s109 + $0x88] sm:$0x3]
    %v304 = vld [vmem:[%s109 + $0x90] sm:$0xff]
    %v305 = vld [vmem:[%s109 + $0x98] sm:$0xff]
    %v306 = vld [vmem:[%s109 + $0xa0] sm:$0x3]
    %v307 = vld [vmem:[%s109 + $0xa8] sm:$0xff]
    %v308 = vld [vmem:[%s109 + $0xb0] sm:$0xff]
    %v309 = vld [vmem:[%s109 + $0xb8] sm:$0x3]
    %v310 = vld [vmem:[%s109 + $0xc0] sm:$0xff]
    %v311 = vld [vmem:[%s109 + $0xc8] sm:$0xff]
    %v312 = vld [vmem:[%s109 + $0xd0] sm:$0x3]
    %v313 = vld [vmem:[%s109 + $0xd8] sm:$0xff]
    %v314 = vld [vmem:[%s109 + $0xe0] sm:$0xff]
    %v315 = vld [vmem:[%s109 + $0xe8] sm:$0x3]
    %v316 = vld [vmem:[%s109 + $0xf0] sm:$0xff]
    %v317 = vld [vmem:[%s109 + $0xf8] sm:$0xff]
    %v318 = vld [vmem:[%s109 + $0x100] sm:$0x3]
    %v319 = vld [vmem:[%s109 + $0x108] sm:$0xff]
    %v320 = vld [vmem:[%s109 + $0x110] sm:$0xff]
    %v321 = vld [vmem:[%s109 + $0x118] sm:$0x3]
    %v322 = vld [vmem:[%s109 + $0x120] sm:$0xff]
    %v323 = vld [vmem:[%s109 + $0x128] sm:$0xff]
    %v324 = vld [vmem:[%s109 + $0x130] sm:$0x3]
    %v325 = vld [vmem:[%s109 + $0x138] sm:$0xff]
    %v326 = vld [vmem:[%s109 + $0x140] sm:$0xff]
    %v327 = vld [vmem:[%s109 + $0x148] sm:$0x3]
    %v328 = vld [vmem:[%s109 + $0x150] sm:$0xff]
    %v329 = vld [vmem:[%s109 + $0x158] sm:$0xff]
    %v330 = vld [vmem:[%s109 + $0x160] sm:$0x3]
    %v331 = vld [vmem:[%s109 + $0x168] sm:$0xff]
    %v332 = vld [vmem:[%s109 + $0x170] sm:$0xff]
    %v333 = vld [vmem:[%s109 + $0x178] sm:$0x3]
    %v334 = vadd.f32 %v238, %v286
    %v335 = vadd.f32 %v239, %v287
    %v336 = vadd.f32 %v240, %v288
    %v337 = vadd.f32 %v241, %v289
    %v338 = vadd.f32 %v242, %v290
    %v339 = vadd.f32 %v243, %v291
    %v340 = vadd.f32 %v244, %v292
    %v341 = vadd.f32 %v245, %v293
    %v342 = vadd.f32 %v246, %v294
    %v343 = vadd.f32 %v247, %v295
    %v344 = vadd.f32 %v248, %v296
    %v345 = vadd.f32 %v249, %v297
    %v346 = vadd.f32 %v250, %v298
    %v347 = vadd.f32 %v251, %v299
    %v348 = vadd.f32 %v252, %v300
    %v349 = vadd.f32 %v253, %v301
    %v350 = vadd.f32 %v254, %v302
    %v351 = vadd.f32 %v255, %v303
    %v352 = vadd.f32 %v256, %v304
    %v353 = vadd.f32 %v257, %v305
    %v354 = vadd.f32 %v258, %v306
    %v355 = vadd.f32 %v259, %v307
    %v356 = vadd.f32 %v260, %v308
    %v357 = vadd.f32 %v261, %v309
    %v358 = vadd.f32 %v262, %v310
    %v359 = vadd.f32 %v263, %v311
    %v360 = vadd.f32 %v264, %v312
    %v361 = vadd.f32 %v265, %v313
    %v362 = vadd.f32 %v266, %v314
    %v363 = vadd.f32 %v267, %v315
    %v364 = vadd.f32 %v268, %v316
    %v365 = vadd.f32 %v269, %v317
    %v366 = vadd.f32 %v270, %v318
    %v367 = vadd.f32 %v271, %v319
    %v368 = vadd.f32 %v272, %v320
    %v369 = vadd.f32 %v273, %v321
    %v370 = vadd.f32 %v274, %v322
    %v371 = vadd.f32 %v275, %v323
    %v372 = vadd.f32 %v276, %v324
    %v373 = vadd.f32 %v277, %v325
    %v374 = vadd.f32 %v278, %v326
    %v375 = vadd.f32 %v279, %v327
    %v376 = vadd.f32 %v280, %v328
    %v377 = vadd.f32 %v281, %v329
    %v378 = vadd.f32 %v282, %v330
    %v379 = vadd.f32 %v283, %v331
    %v380 = vadd.f32 %v284, %v332
    %v381 = vadd.f32 %v285, %v333
    %382 = vst [vmem:[#allocation3] sm:$0xff] %v334
    %383 = vst [vmem:[#allocation3 + $0x8] sm:$0xff] %v335
    %384 = vst [vmem:[#allocation3 + $0x10] sm:$0x3] %v336
    %385 = vst [vmem:[#allocation3 + $0x18] sm:$0xff] %v337
    %386 = vst [vmem:[#allocation3 + $0x20] sm:$0xff] %v338
    %387 = vst [vmem:[#allocation3 + $0x28] sm:$0x3] %v339
    %388 = vst [vmem:[#allocation3 + $0x30] sm:$0xff] %v340
    %389 = vst [vmem:[#allocation3 + $0x38] sm:$0xff] %v341
    %390 = vst [vmem:[#allocation3 + $0x40] sm:$0x3] %v342
    %391 = vst [vmem:[#allocation3 + $0x48] sm:$0xff] %v343
    %392 = vst [vmem:[#allocation3 + $0x50] sm:$0xff] %v344
    %393 = vst [vmem:[#allocation3 + $0x58] sm:$0x3] %v345
    %394 = vst [vmem:[#allocation3 + $0x60] sm:$0xff] %v346
    %395 = vst [vmem:[#allocation3 + $0x68] sm:$0xff] %v347
    %396 = vst [vmem:[#allocation3 + $0x70] sm:$0x3] %v348
    %397 = vst [vmem:[#allocation3 + $0x78] sm:$0xff] %v349
    %398 = vst [vmem:[#allocation3 + $0x80] sm:$0xff] %v350
    %399 = vst [vmem:[#allocation3 + $0x88] sm:$0x3] %v351
    %400 = vst [vmem:[#allocation3 + $0x90] sm:$0xff] %v352
    %401 = vst [vmem:[#allocation3 + $0x98] sm:$0xff] %v353
    %402 = vst [vmem:[#allocation3 + $0xa0] sm:$0x3] %v354
    %403 = vst [vmem:[#allocation3 + $0xa8] sm:$0xff] %v355
    %404 = vst [vmem:[#allocation3 + $0xb0] sm:$0xff] %v356
    %405 = vst [vmem:[#allocation3 + $0xb8] sm:$0x3] %v357
    %406 = vst [vmem:[#allocation3 + $0xc0] sm:$0xff] %v358
    %407 = vst [vmem:[#allocation3 + $0xc8] sm:$0xff] %v359
    %408 = vst [vmem:[#allocation3 + $0xd0] sm:$0x3] %v360
    %409 = vst [vmem:[#allocation3 + $0xd8] sm:$0xff] %v361
    %410 = vst [vmem:[#allocation3 + $0xe0] sm:$0xff] %v362
    %411 = vst [vmem:[#allocation3 + $0xe8] sm:$0x3] %v363
    %412 = vst [vmem:[#allocation3 + $0xf0] sm:$0xff] %v364
    %413 = vst [vmem:[#allocation3 + $0xf8] sm:$0xff] %v365
    %414 = vst [vmem:[#allocation3 + $0x100] sm:$0x3] %v366
    %415 = vst [vmem:[#allocation3 + $0x108] sm:$0xff] %v367
    %416 = vst [vmem:[#allocation3 + $0x110] sm:$0xff] %v368
    %417 = vst [vmem:[#allocation3 + $0x118] sm:$0x3] %v369
    %418 = vst [vmem:[#allocation3 + $0x120] sm:$0xff] %v370
    %419 = vst [vmem:[#allocation3 + $0x128] sm:$0xff] %v371
    %420 = vst [vmem:[#allocation3 + $0x130] sm:$0x3] %v372
    %421 = vst [vmem:[#allocation3 + $0x138] sm:$0xff] %v373
    %422 = vst [vmem:[#allocation3 + $0x140] sm:$0xff] %v374
    %423 = vst [vmem:[#allocation3 + $0x148] sm:$0x3] %v375
    %424 = vst [vmem:[#allocation3 + $0x150] sm:$0xff] %v376
    %425 = vst [vmem:[#allocation3 + $0x158] sm:$0xff] %v377
    %426 = vst [vmem:[#allocation3 + $0x160] sm:$0x3] %v378
    %427 = vst [vmem:[#allocation3 + $0x168] sm:$0xff] %v379
    %428 = vst [vmem:[#allocation3 + $0x170] sm:$0xff] %v380
    %429 = vst [vmem:[#allocation3 + $0x178] sm:$0x3] %v381
    %v430 = vld [vmem:[#allocation3] sm:$0xff]
    %v431 = vld [vmem:[#allocation3 + $0x8] sm:$0xff]
    %v432 = vld [vmem:[#allocation3 + $0x10] sm:$0x3]
    %v433 = vld [vmem:[#allocation3 + $0x18] sm:$0xff]
    %v434 = vld [vmem:[#allocation3 + $0x20] sm:$0xff]
    %v435 = vld [vmem:[#allocation3 + $0x28] sm:$0x3]
    %v436 = vld [vmem:[#allocation3 + $0x30] sm:$0xff]
    %v437 = vld [vmem:[#allocation3 + $0x38] sm:$0xff]
    %v438 = vld [vmem:[#allocation3 + $0x40] sm:$0x3]
    %v439 = vld [vmem:[#allocation3 + $0x48] sm:$0xff]
    %v440 = vld [vmem:[#allocation3 + $0x50] sm:$0xff]
    %v441 = vld [vmem:[#allocation3 + $0x58] sm:$0x3]
    %v442 = vld [vmem:[#allocation3 + $0x60] sm:$0xff]
    %v443 = vld [vmem:[#allocation3 + $0x68] sm:$0xff]
    %v444 = vld [vmem:[#allocation3 + $0x70] sm:$0x3]
    %v445 = vld [vmem:[#allocation3 + $0x78] sm:$0xff]
    %v446 = vld [vmem:[#allocation3 + $0x80] sm:$0xff]
    %v447 = vld [vmem:[#allocation3 + $0x88] sm:$0x3]
    %v448 = vld [vmem:[#allocation3 + $0x90] sm:$0xff]
    %v449 = vld [vmem:[#allocation3 + $0x98] sm:$0xff]
    %v450 = vld [vmem:[#allocation3 + $0xa0] sm:$0x3]
    %v451 = vld [vmem:[#allocation3 + $0xa8] sm:$0xff]
    %v452 = vld [vmem:[#allocation3 + $0xb0] sm:$0xff]
    %v453 = vld [vmem:[#allocation3 + $0xb8] sm:$0x3]
    %v454 = vld [vmem:[#allocation3 + $0xc0] sm:$0xff]
    %v455 = vld [vmem:[#allocation3 + $0xc8] sm:$0xff]
    %v456 = vld [vmem:[#allocation3 + $0xd0] sm:$0x3]
    %v457 = vld [vmem:[#allocation3 + $0xd8] sm:$0xff]
    %v458 = vld [vmem:[#allocation3 + $0xe0] sm:$0xff]
    %v459 = vld [vmem:[#allocation3 + $0xe8] sm:$0x3]
    %v460 = vld [vmem:[#allocation3 + $0xf0] sm:$0xff]
    %v461 = vld [vmem:[#allocation3 + $0xf8] sm:$0xff]
    %v462 = vld [vmem:[#allocation3 + $0x100] sm:$0x3]
    %v463 = vld [vmem:[#allocation3 + $0x108] sm:$0xff]
    %v464 = vld [vmem:[#allocation3 + $0x110] sm:$0xff]
    %v465 = vld [vmem:[#allocation3 + $0x118] sm:$0x3]
    %v466 = vld [vmem:[#allocation3 + $0x120] sm:$0xff]
    %v467 = vld [vmem:[#allocation3 + $0x128] sm:$0xff]
    %v468 = vld [vmem:[#allocation3 + $0x130] sm:$0x3]
    %v469 = vld [vmem:[#allocation3 + $0x138] sm:$0xff]
    %v470 = vld [vmem:[#allocation3 + $0x140] sm:$0xff]
    %v471 = vld [vmem:[#allocation3 + $0x148] sm:$0x3]
    %v472 = vld [vmem:[#allocation3 + $0x150] sm:$0xff]
    %v473 = vld [vmem:[#allocation3 + $0x158] sm:$0xff]
    %v474 = vld [vmem:[#allocation3 + $0x160] sm:$0x3]
    %v475 = vld [vmem:[#allocation3 + $0x168] sm:$0xff]
    %v476 = vld [vmem:[#allocation3 + $0x170] sm:$0xff]
    %v477 = vld [vmem:[#allocation3 + $0x178] sm:$0x3]
    %s478 = scalar_lea.vmem [#allocation2], 48
    %v479 = vld [vmem:[%s478] sm:$0xff]
    %v480 = vld [vmem:[%s478 + $0x8] sm:$0xff]
    %v481 = vld [vmem:[%s478 + $0x10] sm:$0x3]
    %v482 = vld [vmem:[%s478 + $0x18] sm:$0xff]
    %v483 = vld [vmem:[%s478 + $0x20] sm:$0xff]
    %v484 = vld [vmem:[%s478 + $0x28] sm:$0x3]
    %v485 = vld [vmem:[%s478 + $0x30] sm:$0xff]
    %v486 = vld [vmem:[%s478 + $0x38] sm:$0xff]
    %v487 = vld [vmem:[%s478 + $0x40] sm:$0x3]
    %v488 = vld [vmem:[%s478 + $0x48] sm:$0xff]
    %v489 = vld [vmem:[%s478 + $0x50] sm:$0xff]
    %v490 = vld [vmem:[%s478 + $0x58] sm:$0x3]
    %v491 = vld [vmem:[%s478 + $0x60] sm:$0xff]
    %v492 = vld [vmem:[%s478 + $0x68] sm:$0xff]
    %v493 = vld [vmem:[%s478 + $0x70] sm:$0x3]
    %v494 = vld [vmem:[%s478 + $0x78] sm:$0xff]
    %v495 = vld [vmem:[%s478 + $0x80] sm:$0xff]
    %v496 = vld [vmem:[%s478 + $0x88] sm:$0x3]
    %v497 = vld [vmem:[%s478 + $0x90] sm:$0xff]
    %v498 = vld [vmem:[%s478 + $0x98] sm:$0xff]
    %v499 = vld [vmem:[%s478 + $0xa0] sm:$0x3]
    %v500 = vld [vmem:[%s478 + $0xa8] sm:$0xff]
    %v501 = vld [vmem:[%s478 + $0xb0] sm:$0xff]
    %v502 = vld [vmem:[%s478 + $0xb8] sm:$0x3]
    %v503 = vld [vmem:[%s478 + $0xc0] sm:$0xff]
    %v504 = vld [vmem:[%s478 + $0xc8] sm:$0xff]
    %v505 = vld [vmem:[%s478 + $0xd0] sm:$0x3]
    %v506 = vld [vmem:[%s478 + $0xd8] sm:$0xff]
    %v507 = vld [vmem:[%s478 + $0xe0] sm:$0xff]
    %v508 = vld [vmem:[%s478 + $0xe8] sm:$0x3]
    %v509 = vld [vmem:[%s478 + $0xf0] sm:$0xff]
    %v510 = vld [vmem:[%s478 + $0xf8] sm:$0xff]
    %v511 = vld [vmem:[%s478 + $0x100] sm:$0x3]
    %v512 = vld [vmem:[%s478 + $0x108] sm:$0xff]
    %v513 = vld [vmem:[%s478 + $0x110] sm:$0xff]
    %v514 = vld [vmem:[%s478 + $0x118] sm:$0x3]
    %v515 = vld [vmem:[%s478 + $0x120] sm:$0xff]
    %v516 = vld [vmem:[%s478 + $0x128] sm:$0xff]
    %v517 = vld [vmem:[%s478 + $0x130] sm:$0x3]
    %v518 = vld [vmem:[%s478 + $0x138] sm:$0xff]
    %v519 = vld [vmem:[%s478 + $0x140] sm:$0xff]
    %v520 = vld [vmem:[%s478 + $0x148] sm:$0x3]
    %v521 = vld [vmem:[%s478 + $0x150] sm:$0xff]
    %v522 = vld [vmem:[%s478 + $0x158] sm:$0xff]
    %v523 = vld [vmem:[%s478 + $0x160] sm:$0x3]
    %v524 = vld [vmem:[%s478 + $0x168] sm:$0xff]
    %v525 = vld [vmem:[%s478 + $0x170] sm:$0xff]
    %v526 = vld [vmem:[%s478 + $0x178] sm:$0x3]
    %v527 = vadd.f32 %v430, %v479
    %v528 = vadd.f32 %v431, %v480
    %v529 = vadd.f32 %v432, %v481
    %v530 = vadd.f32 %v433, %v482
    %v531 = vadd.f32 %v434, %v483
    %v532 = vadd.f32 %v435, %v484
    %v533 = vadd.f32 %v436, %v485
    %v534 = vadd.f32 %v437, %v486
    %v535 = vadd.f32 %v438, %v487
    %v536 = vadd.f32 %v439, %v488
    %v537 = vadd.f32 %v440, %v489
    %v538 = vadd.f32 %v441, %v490
    %v539 = vadd.f32 %v442, %v491
    %v540 = vadd.f32 %v443, %v492
    %v541 = vadd.f32 %v444, %v493
    %v542 = vadd.f32 %v445, %v494
    %v543 = vadd.f32 %v446, %v495
    %v544 = vadd.f32 %v447, %v496
    %v545 = vadd.f32 %v448, %v497
    %v546 = vadd.f32 %v449, %v498
    %v547 = vadd.f32 %v450, %v499
    %v548 = vadd.f32 %v451, %v500
    %v549 = vadd.f32 %v452, %v501
    %v550 = vadd.f32 %v453, %v502
    %v551 = vadd.f32 %v454, %v503
    %v552 = vadd.f32 %v455, %v504
    %v553 = vadd.f32 %v456, %v505
    %v554 = vadd.f32 %v457, %v506
    %v555 = vadd.f32 %v458, %v507
    %v556 = vadd.f32 %v459, %v508
    %v557 = vadd.f32 %v460, %v509
    %v558 = vadd.f32 %v461, %v510
    %v559 = vadd.f32 %v462, %v511
    %v560 = vadd.f32 %v463, %v512
    %v561 = vadd.f32 %v464, %v513
    %v562 = vadd.f32 %v465, %v514
    %v563 = vadd.f32 %v466, %v515
    %v564 = vadd.f32 %v467, %v516
    %v565 = vadd.f32 %v468, %v517
    %v566 = vadd.f32 %v469, %v518
    %v567 = vadd.f32 %v470, %v519
    %v568 = vadd.f32 %v471, %v520
    %v569 = vadd.f32 %v472, %v521
    %v570 = vadd.f32 %v473, %v522
    %v571 = vadd.f32 %v474, %v523
    %v572 = vadd.f32 %v475, %v524
    %v573 = vadd.f32 %v476, %v525
    %v574 = vadd.f32 %v477, %v526
    %575 = vst [vmem:[#allocation3] sm:$0xff] %v527
    %576 = vst [vmem:[#allocation3 + $0x8] sm:$0xff] %v528
    %577 = vst [vmem:[#allocation3 + $0x10] sm:$0x3] %v529
    %578 = vst [vmem:[#allocation3 + $0x18] sm:$0xff] %v530
    %579 = vst [vmem:[#allocation3 + $0x20] sm:$0xff] %v531
    %580 = vst [vmem:[#allocation3 + $0x28] sm:$0x3] %v532
    %581 = vst [vmem:[#allocation3 + $0x30] sm:$0xff] %v533
    %582 = vst [vmem:[#allocation3 + $0x38] sm:$0xff] %v534
    %583 = vst [vmem:[#allocation3 + $0x40] sm:$0x3] %v535
    %584 = vst [vmem:[#allocation3 + $0x48] sm:$0xff] %v536
    %585 = vst [vmem:[#allocation3 + $0x50] sm:$0xff] %v537
    %586 = vst [vmem:[#allocation3 + $0x58] sm:$0x3] %v538
    %587 = vst [vmem:[#allocation3 + $0x60] sm:$0xff] %v539
    %588 = vst [vmem:[#allocation3 + $0x68] sm:$0xff] %v540
    %589 = vst [vmem:[#allocation3 + $0x70] sm:$0x3] %v541
    %590 = vst [vmem:[#allocation3 + $0x78] sm:$0xff] %v542
    %591 = vst [vmem:[#allocation3 + $0x80] sm:$0xff] %v543
    %592 = vst [vmem:[#allocation3 + $0x88] sm:$0x3] %v544
    %593 = vst [vmem:[#allocation3 + $0x90] sm:$0xff] %v545
    %594 = vst [vmem:[#allocation3 + $0x98] sm:$0xff] %v546
    %595 = vst [vmem:[#allocation3 + $0xa0] sm:$0x3] %v547
    %596 = vst [vmem:[#allocation3 + $0xa8] sm:$0xff] %v548
    %597 = vst [vmem:[#allocation3 + $0xb0] sm:$0xff] %v549
    %598 = vst [vmem:[#allocation3 + $0xb8] sm:$0x3] %v550
    %599 = vst [vmem:[#allocation3 + $0xc0] sm:$0xff] %v551
    %600 = vst [vmem:[#allocation3 + $0xc8] sm:$0xff] %v552
    %601 = vst [vmem:[#allocation3 + $0xd0] sm:$0x3] %v553
    %602 = vst [vmem:[#allocation3 + $0xd8] sm:$0xff] %v554
    %603 = vst [vmem:[#allocation3 + $0xe0] sm:$0xff] %v555
    %604 = vst [vmem:[#allocation3 + $0xe8] sm:$0x3] %v556
    %605 = vst [vmem:[#allocation3 + $0xf0] sm:$0xff] %v557
    %606 = vst [vmem:[#allocation3 + $0xf8] sm:$0xff] %v558
    %607 = vst [vmem:[#allocation3 + $0x100] sm:$0x3] %v559
    %608 = vst [vmem:[#allocation3 + $0x108] sm:$0xff] %v560
    %609 = vst [vmem:[#allocation3 + $0x110] sm:$0xff] %v561
    %610 = vst [vmem:[#allocation3 + $0x118] sm:$0x3] %v562
    %611 = vst [vmem:[#allocation3 + $0x120] sm:$0xff] %v563
    %612 = vst [vmem:[#allocation3 + $0x128] sm:$0xff] %v564
    %613 = vst [vmem:[#allocation3 + $0x130] sm:$0x3] %v565
    %614 = vst [vmem:[#allocation3 + $0x138] sm:$0xff] %v566
    %615 = vst [vmem:[#allocation3 + $0x140] sm:$0xff] %v567
    %616 = vst [vmem:[#allocation3 + $0x148] sm:$0x3] %v568
    %617 = vst [vmem:[#allocation3 + $0x150] sm:$0xff] %v569
    %618 = vst [vmem:[#allocation3 + $0x158] sm:$0xff] %v570
    %619 = vst [vmem:[#allocation3 + $0x160] sm:$0x3] %v571
    %620 = vst [vmem:[#allocation3 + $0x168] sm:$0xff] %v572
    %621 = vst [vmem:[#allocation3 + $0x170] sm:$0xff] %v573
    %622 = vst [vmem:[#allocation3 + $0x178] sm:$0x3] %v574
    %v623 = vld [vmem:[#allocation3] sm:$0xff]
    %v624 = vld [vmem:[#allocation3 + $0x8] sm:$0xff]
    %v625 = vld [vmem:[#allocation3 + $0x18] sm:$0xff]
    %v626 = vld [vmem:[#allocation3 + $0x20] sm:$0xff]
    %v627 = vld [vmem:[#allocation3 + $0x30] sm:$0xff]
    %v628 = vld [vmem:[#allocation3 + $0x38] sm:$0xff]
    %v629 = vld [vmem:[#allocation3 + $0x48] sm:$0xff]
    %v630 = vld [vmem:[#allocation3 + $0x50] sm:$0xff]
    %v631 = vld [vmem:[#allocation3 + $0x60] sm:$0xff]
    %v632 = vld [vmem:[#allocation3 + $0x68] sm:$0xff]
    %v633 = vld [vmem:[#allocation3 + $0x78] sm:$0xff]
    %v634 = vld [vmem:[#allocation3 + $0x80] sm:$0xff]
    %v635 = vld [vmem:[#allocation3 + $0x90] sm:$0xff]
    %v636 = vld [vmem:[#allocation3 + $0x98] sm:$0xff]
    %v637 = vld [vmem:[#allocation3 + $0xa8] sm:$0xff]
    %v638 = vld [vmem:[#allocation3 + $0xb0] sm:$0xff]
    %v639 = vld [vmem:[#allocation3 + $0xc0] sm:$0xff]
    %v640 = vld [vmem:[#allocation3 + $0xc8] sm:$0xff]
    %v641 = vld [vmem:[#allocation3 + $0xd8] sm:$0xff]
    %v642 = vld [vmem:[#allocation3 + $0xe0] sm:$0xff]
    %v643 = vld [vmem:[#allocation3 + $0xf0] sm:$0xff]
    %v644 = vld [vmem:[#allocation3 + $0xf8] sm:$0xff]
    %v645 = vld [vmem:[#allocation3 + $0x108] sm:$0xff]
    %v646 = vld [vmem:[#allocation3 + $0x110] sm:$0xff]
    %v647 = vld [vmem:[#allocation3 + $0x120] sm:$0xff]
    %v648 = vld [vmem:[#allocation3 + $0x128] sm:$0xff]
    %v649 = vld [vmem:[#allocation3 + $0x138] sm:$0xff]
    %v650 = vld [vmem:[#allocation3 + $0x140] sm:$0xff]
    %v651 = vld [vmem:[#allocation3 + $0x150] sm:$0xff]
    %v652 = vld [vmem:[#allocation3 + $0x158] sm:$0xff]
    %v653 = vld [vmem:[#allocation3 + $0x168] sm:$0xff]
    %v654 = vld [vmem:[#allocation3 + $0x170] sm:$0xff]
    %v655 = vld [vmem:[#allocation3 + $0x1] sm:$0xff]
    %v656 = vld [vmem:[#allocation3 + $0x9] sm:$0xff]
    %v657 = vld [vmem:[#allocation3 + $0x19] sm:$0xff]
    %v658 = vld [vmem:[#allocation3 + $0x21] sm:$0xff]
    %v659 = vld [vmem:[#allocation3 + $0x31] sm:$0xff]
    %v660 = vld [vmem:[#allocation3 + $0x39] sm:$0xff]
    %v661 = vld [vmem:[#allocation3 + $0x49] sm:$0xff]
    %v662 = vld [vmem:[#allocation3 + $0x51] sm:$0xff]
    %v663 = vld [vmem:[#allocation3 + $0x61] sm:$0xff]
    %v664 = vld [vmem:[#allocation3 + $0x69] sm:$0xff]
    %v665 = vld [vmem:[#allocation3 + $0x79] sm:$0xff]
    %v666 = vld [vmem:[#allocation3 + $0x81] sm:$0xff]
    %v667 = vld [vmem:[#allocation3 + $0x91] sm:$0xff]
    %v668 = vld [vmem:[#allocation3 + $0x99] sm:$0xff]
    %v669 = vld [vmem:[#allocation3 + $0xa9] sm:$0xff]
    %v670 = vld [vmem:[#allocation3 + $0xb1] sm:$0xff]
    %v671 = vld [vmem:[#allocation3 + $0xc1] sm:$0xff]
    %v672 = vld [vmem:[#allocation3 + $0xc9] sm:$0xff]
    %v673 = vld [vmem:[#allocation3 + $0xd9] sm:$0xff]
    %v674 = vld [vmem:[#allocation3 + $0xe1] sm:$0xff]
    %v675 = vld [vmem:[#allocation3 + $0xf1] sm:$0xff]
    %v676 = vld [vmem:[#allocation3 + $0xf9] sm:$0xff]
    %v677 = vld [vmem:[#allocation3 + $0x109] sm:$0xff]
    %v678 = vld [vmem:[#allocation3 + $0x111] sm:$0xff]
    %v679 = vld [vmem:[#allocation3 + $0x121] sm:$0xff]
    %v680 = vld [vmem:[#allocation3 + $0x129] sm:$0xff]
    %v681 = vld [vmem:[#allocation3 + $0x139] sm:$0xff]
    %v682 = vld [vmem:[#allocation3 + $0x141] sm:$0xff]
    %v683 = vld [vmem:[#allocation3 + $0x151] sm:$0xff]
    %v684 = vld [vmem:[#allocation3 + $0x159] sm:$0xff]
    %v685 = vld [vmem:[#allocation3 + $0x169] sm:$0xff]
    %v686 = vld [vmem:[#allocation3 + $0x171] sm:$0xff]
    %v687 = vadd.f32 %v623, %v655
    %v688 = vadd.f32 %v624, %v656
    %v689 = vadd.f32 %v625, %v657
    %v690 = vadd.f32 %v626, %v658
    %v691 = vadd.f32 %v627, %v659
    %v692 = vadd.f32 %v628, %v660
    %v693 = vadd.f32 %v629, %v661
    %v694 = vadd.f32 %v630, %v662
    %v695 = vadd.f32 %v631, %v663
    %v696 = vadd.f32 %v632, %v664
    %v697 = vadd.f32 %v633, %v665
    %v698 = vadd.f32 %v634, %v666
    %v699 = vadd.f32 %v635, %v667
    %v700 = vadd.f32 %v636, %v668
    %v701 = vadd.f32 %v637, %v669
    %v702 = vadd.f32 %v638, %v670
    %v703 = vadd.f32 %v639, %v671
    %v704 = vadd.f32 %v640, %v672
    %v705 = vadd.f32 %v641, %v673
    %v706 = vadd.f32 %v642, %v674
    %v707 = vadd.f32 %v643, %v675
    %v708 = vadd.f32 %v644, %v676
    %v709 = vadd.f32 %v645, %v677
    %v710 = vadd.f32 %v646, %v678
    %v711 = vadd.f32 %v647, %v679
    %v712 = vadd.f32 %v648, %v680
    %v713 = vadd.f32 %v649, %v681
    %v714 = vadd.f32 %v650, %v682
    %v715 = vadd.f32 %v651, %v683
    %v716 = vadd.f32 %v652, %v684
    %v717 = vadd.f32 %v653, %v685
    %v718 = vadd.f32 %v654, %v686
    %v719 = vld [vmem:[#allocation3 + $0x2] sm:$0xff]
    %v720 = vld [vmem:[#allocation3 + $0xa] sm:$0xff]
    %v721 = vld [vmem:[#allocation3 + $0x1a] sm:$0xff]
    %v722 = vld [vmem:[#allocation3 + $0x22] sm:$0xff]
    %v723 = vld [vmem:[#allocation3 + $0x32] sm:$0xff]
    %v724 = vld [vmem:[#allocation3 + $0x3a] sm:$0xff]
    %v725 = vld [vmem:[#allocation3 + $0x4a] sm:$0xff]
    %v726 = vld [vmem:[#allocation3 + $0x52] sm:$0xff]
    %v727 = vld [vmem:[#allocation3 + $0x62] sm:$0xff]
    %v728 = vld [vmem:[#allocation3 + $0x6a] sm:$0xff]
    %v729 = vld [vmem:[#allocation3 + $0x7a] sm:$0xff]
    %v730 = vld [vmem:[#allocation3 + $0x82] sm:$0xff]
    %v731 = vld [vmem:[#allocation3 + $0x92] sm:$0xff]
    %v732 = vld [vmem:[#allocation3 + $0x9a] sm:$0xff]
    %v733 = vld [vmem:[#allocation3 + $0xaa] sm:$0xff]
    %v734 = vld [vmem:[#allocation3 + $0xb2] sm:$0xff]
    %v735 = vld [vmem:[#allocation3 + $0xc2] sm:$0xff]
    %v736 = vld [vmem:[#allocation3 + $0xca] sm:$0xff]
    %v737 = vld [vmem:[#allocation3 + $0xda] sm:$0xff]
    %v738 = vld [vmem:[#allocation3 + $0xe2] sm:$0xff]
    %v739 = vld [vmem:[#allocation3 + $0xf2] sm:$0xff]
    %v740 = vld [vmem:[#allocation3 + $0xfa] sm:$0xff]
    %v741 = vld [vmem:[#allocation3 + $0x10a] sm:$0xff]
    %v742 = vld [vmem:[#allocation3 + $0x112] sm:$0xff]
    %v743 = vld [vmem:[#allocation3 + $0x122] sm:$0xff]
    %v744 = vld [vmem:[#allocation3 + $0x12a] sm:$0xff]
    %v745 = vld [vmem:[#allocation3 + $0x13a] sm:$0xff]
    %v746 = vld [vmem:[#allocation3 + $0x142] sm:$0xff]
    %v747 = vld [vmem:[#allocation3 + $0x152] sm:$0xff]
    %v748 = vld [vmem:[#allocation3 + $0x15a] sm:$0xff]
    %v749 = vld [vmem:[#allocation3 + $0x16a] sm:$0xff]
    %v750 = vld [vmem:[#allocation3 + $0x172] sm:$0xff]
    %v751 = vadd.f32 %v687, %v719
    %v752 = vadd.f32 %v688, %v720
    %v753 = vadd.f32 %v689, %v721
    %v754 = vadd.f32 %v690, %v722
    %v755 = vadd.f32 %v691, %v723
    %v756 = vadd.f32 %v692, %v724
    %v757 = vadd.f32 %v693, %v725
    %v758 = vadd.f32 %v694, %v726
    %v759 = vadd.f32 %v695, %v727
    %v760 = vadd.f32 %v696, %v728
    %v761 = vadd.f32 %v697, %v729
    %v762 = vadd.f32 %v698, %v730
    %v763 = vadd.f32 %v699, %v731
    %v764 = vadd.f32 %v700, %v732
    %v765 = vadd.f32 %v701, %v733
    %v766 = vadd.f32 %v702, %v734
    %v767 = vadd.f32 %v703, %v735
    %v768 = vadd.f32 %v704, %v736
    %v769 = vadd.f32 %v705, %v737
    %v770 = vadd.f32 %v706, %v738
    %v771 = vadd.f32 %v707, %v739
    %v772 = vadd.f32 %v708, %v740
    %v773 = vadd.f32 %v709, %v741
    %v774 = vadd.f32 %v710, %v742
    %v775 = vadd.f32 %v711, %v743
    %v776 = vadd.f32 %v712, %v744
    %v777 = vadd.f32 %v713, %v745
    %v778 = vadd.f32 %v714, %v746
    %v779 = vadd.f32 %v715, %v747
    %v780 = vadd.f32 %v716, %v748
    %v781 = vadd.f32 %v717, %v749
    %v782 = vadd.f32 %v718, %v750
    %v783 = vmul.f32 %v751, 0.11111111
    %v784 = vmul.f32 %v752, 0.11111111
    %v785 = vmul.f32 %v753, 0.11111111
    %v786 = vmul.f32 %v754, 0.11111111
    %v787 = vmul.f32 %v755, 0.11111111
    %v788 = vmul.f32 %v756, 0.11111111
    %v789 = vmul.f32 %v757, 0.11111111
    %v790 = vmul.f32 %v758, 0.11111111
    %v791 = vmul.f32 %v759, 0.11111111
    %v792 = vmul.f32 %v760, 0.11111111
    %v793 = vmul.f32 %v761, 0.11111111
    %v794 = vmul.f32 %v762, 0.11111111
    %v795 = vmul.f32 %v763, 0.11111111
    %v796 = vmul.f32 %v764, 0.11111111
    %v797 = vmul.f32 %v765, 0.11111111
    %v798 = vmul.f32 %v766, 0.11111111
    %v799 = vmul.f32 %v767, 0.11111111
    %v800 = vmul.f32 %v768, 0.11111111
    %v801 = vmul.f32 %v769, 0.11111111
    %v802 = vmul.f32 %v770, 0.11111111
    %v803 = vmul.f32 %v771, 0.11111111
    %v804 = vmul.f32 %v772, 0.11111111
    %v805 = vmul.f32 %v773, 0.11111111
    %v806 = vmul.f32 %v774, 0.11111111
    %v807 = vmul.f32 %v775, 0.11111111
    %v808 = vmul.f32 %v776, 0.11111111
    %v809 = vmul.f32 %v777, 0.11111111
    %v810 = vmul.f32 %v778, 0.11111111
    %v811 = vmul.f32 %v779, 0.11111111
    %v812 = vmul.f32 %v780, 0.11111111
    %v813 = vmul.f32 %v781, 0.11111111
    %v814 = vmul.f32 %v782, 0.11111111
    %815 = vst [vmem:[#allocation7] sm:$0xff] %v783
    %816 = vst [vmem:[#allocation7 + $0x8] sm:$0xff] %v784
    %817 = vst [vmem:[#allocation7 + $0x10] sm:$0xff] %v785
    %818 = vst [vmem:[#allocation7 + $0x18] sm:$0xff] %v786
    %819 = vst [vmem:[#allocation7 + $0x20] sm:$0xff] %v787
    %820 = vst [vmem:[#allocation7 + $0x28] sm:$0xff] %v788
    %821 = vst [vmem:[#allocation7 + $0x30] sm:$0xff] %v789
    %822 = vst [vmem:[#allocation7 + $0x38] sm:$0xff] %v790
    %823 = vst [vmem:[#allocation7 + $0x40] sm:$0xff] %v791
    %824 = vst [vmem:[#allocation7 + $0x48] sm:$0xff] %v792
    %825 = vst [vmem:[#allocation7 + $0x50] sm:$0xff] %v793
    %826 = vst [vmem:[#allocation7 + $0x58] sm:$0xff] %v794
    %827 = vst [vmem:[#allocation7 + $0x60] sm:$0xff] %v795
    %828 = vst [vmem:[#allocation7 + $0x68] sm:$0xff] %v796
    %829 = vst [vmem:[#allocation7 + $0x70] sm:$0xff] %v797
    %830 = vst [vmem:[#allocation7 + $0x78] sm:$0xff] %v798
    %831 = vst [vmem:[#allocation7 + $0x80] sm:$0xff] %v799
    %832 = vst [vmem:[#allocation7 + $0x88] sm:$0xff] %v800
    %833 = vst [vmem:[#allocation7 + $0x90] sm:$0xff] %v801
    %834 = vst [vmem:[#allocation7 + $0x98] sm:$0xff] %v802
    %835 = vst [vmem:[#allocation7 + $0xa0] sm:$0xff] %v803
    %836 = vst [vmem:[#allocation7 + $0xa8] sm:$0xff] %v804
    %837 = vst [vmem:[#allocation7 + $0xb0] sm:$0xff] %v805
    %838 = vst [vmem:[#allocation7 + $0xb8] sm:$0xff] %v806
    %839 = vst [vmem:[#allocation7 + $0xc0] sm:$0xff] %v807
    %840 = vst [vmem:[#allocation7 + $0xc8] sm:$0xff] %v808
    %841 = vst [vmem:[#allocation7 + $0xd0] sm:$0xff] %v809
    %842 = vst [vmem:[#allocation7 + $0xd8] sm:$0xff] %v810
    %843 = vst [vmem:[#allocation7 + $0xe0] sm:$0xff] %v811
    %844 = vst [vmem:[#allocation7 + $0xe8] sm:$0xff] %v812
    %845 = vst [vmem:[#allocation7 + $0xf0] sm:$0xff] %v813
    %846 = vst [vmem:[#allocation7 + $0xf8] sm:$0xff] %v814
    // Predicated region
    $region10: #{tpu_custom_call.1} parent=1 // pred_check
      _
    $region11: #{tpu_custom_call.1} parent=1 // pred_check_branch
      %848 = sbr.rel (0) target = $region13
    $region12: #{tpu_custom_call.1} parent=1 // pred_region
      %s850 = ssub.s32 4096, 4096
      %851 = vsyncadd [#allocation6], %s850
      %s852 = sshll.u32 [#allocation7], 4
      %s853 = int_to_ptr.vmem [resolvable:$true] %s852
      %858 = dma.vmem_to_hbm [thread:$0]  %s853, 4096, %s1, [#allocation6], 128, 128, 8
    $region13: #{tpu_custom_call.1} parent=1 // pred_fallthru
      _
    // Predicated region
    $region14: #{tpu_custom_call.1} parent=1 // pred_check
      _
    $region15: #{tpu_custom_call.1} parent=1 // pred_check_branch
      %860 = sbr.rel (0) target = $region17
    $region16: #{tpu_custom_call.1} parent=1 // pred_region
      %861 = dma.done [#allocation6], 4096
    $region17: #{tpu_custom_call.1} parent=1 // pred_fallthru
      _
    %862 = vsyncpa [#allocation5], 1
    %863 = vsyncpa [#allocation6], 1

</llo_original>
